<compile_context>
chip_gen: v5e
topology: v5e:2x2
jax: 0.10.0
libtpu: 0.0.40
codegen_flags: <defaults>
</compile_context>

<pallas_src>
import functools

import jax
import jax.numpy as jnp
from jax.experimental import pallas as pl
from jax.experimental.pallas import tpu as pltpu


def _layernorm_kernel(x_ref, w_ref, b_ref, o_ref, *, eps):
    # x_ref: (tile_rows, hidden) in VMEM; w_ref/b_ref: (1, hidden) resident in VMEM.
    x = x_ref[...].astype(jnp.float32)
    u = jnp.mean(x, axis=-1, keepdims=True)           # per-row mean over hidden (XLU)
    d = x - u
    s = jnp.mean(d * d, axis=-1, keepdims=True)       # biased variance (two-pass)
    inv = jax.lax.rsqrt(s + eps)                      # EUP rsqrt; eps inside sqrt (TF/BERT style)
    w = w_ref[...].astype(jnp.float32)
    b = b_ref[...].astype(jnp.float32)
    o_ref[...] = (d * inv * w + b).astype(o_ref.dtype)


def _vmem_capacity_bytes():
    """Physical VMEM of the attached TPU; conservative 64 MiB (v7x) fallback."""
    try:
        return int(pltpu.get_tpu_info().vmem_capacity_bytes)
    except Exception:
        return 64 << 20


def _num_tensorcores():
    """TensorCores per device (v7x = 2); default 1 for v5e/v6e/unknown."""
    try:
        info = pltpu.get_tpu_info()
        for attr in ("num_cores", "tensorcore_count", "num_tensorcores", "cores_per_chip"):
            v = getattr(info, attr, None)
            if v:
                return max(1, int(v))
    except Exception:
        pass
    try:
        kind = jax.devices()[0].device_kind.lower()
        if "v7" in kind:
            return 2
    except Exception:
        pass
    return 1


def _choose_tile_rows(rows, hidden, itemsize, vmem_cap, num_cores):
    """Row tile sized by (a) a per-step byte target (HBM-bound amortization),
    (b) a VMEM budget that counts the double-buffered in/out tiles AND the
    fp32 intermediates, (c) grid population only where it helps (multi-TC)."""
    sub = 8 * max(1, 4 // itemsize)          # sublane packing: 8 (f32) / 16 (bf16) / 32 (int8)
    if rows <= sub:
        return rows                           # full-array block

    # VMEM bytes per row of tile: 2x double-buffered input + 2x output tiles at
    # the input dtype, plus ~2 full-tile fp32 intermediates (upcast x and d).
    per_row_bytes = hidden * (4 * itemsize + 2 * 4)
    vmem_rows = max(sub, (vmem_cap // 2) // per_row_bytes)

    # Byte-based cap on the *input* tile per step (not a fixed row count):
    # ~8 MiB on 128 MiB-VMEM parts (v5e/v6e), ~4 MiB on 64 MiB parts (v7x).
    target_in_bytes = (8 << 20) if vmem_cap > (64 << 20) else (4 << 20)
    target_rows = max(sub, target_in_bytes // max(1, hidden * itemsize))

    cap = min(rows, vmem_rows, target_rows)

    # Grid population: single-TC parts only need >=2 steps for double-buffering
    # (and only if the tile would otherwise swallow everything); multi-TC (v7x)
    # wants >=2 steps per core so megacore sharding has work for both cores.
    min_steps = 2 * num_cores
    if rows >= min_steps * sub:
        cap = min(cap, rows // min_steps)

    cap = max(sub, (cap // sub) * sub)        # sublane-aligned

    # Prefer an exact divisor (no masked tail block).  On multi-TC parts prefer
    # a divisor whose step count splits evenly across the cores.
    fallback_divisor = None
    for t in range(cap, sub - 1, -sub):
        if rows % t == 0:
            steps = rows // t
            if num_cores > 1 and steps % num_cores != 0:
                if fallback_divisor is None:
                    fallback_divisor = t
                continue
            return t
    if fallback_divisor is not None:
        return fallback_divisor
    return cap                                # tail block handled by Pallas (OOB writes masked)


def bert_layer_norm(x, weight, bias, eps=1e-12, tile_rows=None):
    """x: (..., hidden); weight/bias: (hidden,). Returns same shape/dtype as x."""
    orig_shape = x.shape
    hidden = orig_shape[-1]
    rows = 1
    for d in orig_shape[:-1]:
        rows *= d

    x2 = x.reshape(rows, hidden)
    w2 = weight.reshape(1, hidden)
    b2 = bias.reshape(1, hidden)

    itemsize = x2.dtype.itemsize
    vmem_cap = _vmem_capacity_bytes()
    num_cores = _num_tensorcores()
    if tile_rows is None:
        tile_rows = _choose_tile_rows(rows, hidden, itemsize, vmem_cap, num_cores)
    tile_rows = max(1, min(int(tile_rows), rows))

    # No host-side padding on the row axis: if tile_rows does not divide rows the
    # last block is partial; OOB input rows cannot contaminate other rows (the
    # reduction is strictly per-row along hidden) and OOB output writes are dropped.
    grid = (pl.cdiv(rows, tile_rows),)

    # Scoped-VMEM budget: double-buffered in/out tiles + fp32 intermediates
    # (x upcast and d) + resident weight/bias, plus fixed compiler headroom.
    buffering = (
        4 * tile_rows * hidden * itemsize      # 2x in + 2x out double buffers
        + 2 * tile_rows * hidden * 4           # fp32 temps live in the body
        + 4 * hidden * 4                       # resident w/b (+ f32 upcasts)
    )
    headroom = 4 << 20                         # Mosaic internal scratch
    vmem_limit = int(min(3 * vmem_cap // 4, max(32 << 20, buffering + headroom)))

    out = pl.pallas_call(
        functools.partial(_layernorm_kernel, eps=eps),
        out_shape=jax.ShapeDtypeStruct((rows, hidden), x.dtype),
        grid_spec=pltpu.PrefetchScalarGridSpec(
            num_scalar_prefetch=0,
            grid=grid,
            in_specs=[
                pl.BlockSpec((tile_rows, hidden), lambda i: (i, 0)),
                # weight/bias: whole (1, hidden) arrays resident in VMEM once
                # (no per-step DMA, no double buffering).
                pl.BlockSpec(memory_space=pltpu.MemorySpace.VMEM),
                pl.BlockSpec(memory_space=pltpu.MemorySpace.VMEM),
            ],
            out_specs=pl.BlockSpec((tile_rows, hidden), lambda i: (i, 0)),
        ),
        compiler_params=pltpu.CompilerParams(
            dimension_semantics=("parallel",),   # no-op on 1-TC parts, shards rows on v7x
            vmem_limit_bytes=vmem_limit,
        ),
    )(x2, w2, b2)

    return out.reshape(orig_shape)


def _reference(x, weight, bias, eps):
    u = x.mean(-1, keepdims=True)
    s = ((x - u) ** 2).mean(-1, keepdims=True)
    return weight * ((x - u) / jnp.sqrt(s + eps)) + bias


if __name__ == "__main__":
    # 1) Small demo shapes matching the module (hidden=32; not lane-dense, but
    #    small). rows = 16 -> single full block.
    batch, seq, hidden = 2, 8, 32
    key = jax.random.PRNGKey(0)
    x = jax.random.normal(key, (batch, seq, hidden), dtype=jnp.float32)
    weight = jnp.ones((hidden,), dtype=jnp.float32)   # nn.Parameter(torch.ones(hidden))
    bias = jnp.zeros((hidden,), dtype=jnp.float32)    # nn.Parameter(torch.zeros(hidden))

    y = bert_layer_norm(x, weight, bias, eps=1e-12)
    jax.block_until_ready(y)
    assert y.shape == x.shape and y.dtype == x.dtype
    assert jnp.allclose(y, _reference(x, weight, bias, 1e-12), atol=1e-5, rtol=1e-5)

    # 2) Lane-dense, multi-grid-step check at a production-like hidden size.
    k1, k2, k3 = jax.random.split(jax.random.PRNGKey(0), 3)
    xb = jax.random.normal(k1, (4, 128, 768), dtype=jnp.float32)
    wb = jax.random.normal(k2, (768,), dtype=jnp.float32)
    bb = jax.random.normal(k3, (768,), dtype=jnp.float32)
    yb = bert_layer_norm(xb, wb, bb, eps=1e-12)
    jax.block_until_ready(yb)
    assert jnp.allclose(yb, _reference(xb, wb, bb, 1e-12), atol=1e-4, rtol=1e-4)

    # 3) Partial tail block: rows=24 with explicit tile_rows=16 -> grid of 2,
    #    last block half-valid. Locks in the OOB-masking behavior.
    xc = jax.random.normal(k1, (3, 8, 128), dtype=jnp.float32)
    wc = jax.random.normal(k2, (128,), dtype=jnp.float32)
    bc = jax.random.normal(k3, (128,), dtype=jnp.float32)
    yc = bert_layer_norm(xc, wc, bc, eps=1e-12, tile_rows=16)
    jax.block_until_ready(yc)
    assert jnp.allclose(yc, _reference(xc, wc, bc, 1e-12), atol=1e-5, rtol=1e-5)

    print("KERNEL_OK")
</pallas_src>

<mosaic_0001>
module attributes {stable_mosaic.version = 11 : i64} {
  func.func @_layernorm_kernel(%arg0: i32, %arg1: memref<8x32xf32, #tpu.memory_space<vmem>>, %arg2: memref<1x32xf32, #tpu.memory_space<vmem>>, %arg3: memref<1x32xf32, #tpu.memory_space<vmem>>, %arg4: memref<8x32xf32, #tpu.memory_space<vmem>>) attributes {dimension_semantics = [#tpu.dimension_semantics<parallel>], iteration_bounds = array<i64: 2>, scalar_prefetch = 0 : i64, scratch_operands = 0 : i64, tpu.core_type = #tpu.core_type<tc>, window_params = [{transform_indices = @transform_0, window_bounds = array<i64: 8, 32>}, {pipeline_mode = #tpu.pipeline_mode<synchronous>, transform_indices = @transform_1, window_bounds = array<i64: 1, 32>}, {pipeline_mode = #tpu.pipeline_mode<synchronous>, transform_indices = @transform_2, window_bounds = array<i64: 1, 32>}, {transform_indices = @transform_3, window_bounds = array<i64: 8, 32>}]} {
    %c0 = arith.constant 0 : index
    %c0_0 = arith.constant 0 : index
    %0 = vector.load %arg1[%c0, %c0_0] : memref<8x32xf32, #tpu.memory_space<vmem>>, vector<8x32xf32>
    %cst = arith.constant dense<0.000000e+00> : vector<8xf32>
    %1 = vector.multi_reduction <add>, %0, %cst [1] : vector<8x32xf32> to vector<8xf32>
    %2 = vector.shape_cast %1 : vector<8xf32> to vector<8x1xf32>
    %cst_1 = arith.constant 3.200000e+01 : f32
    %3 = vector.broadcast %cst_1 : f32 to vector<8x1xf32>
    %4 = arith.divf %2, %3 : vector<8x1xf32>
    %5 = vector.broadcast %4 : vector<8x1xf32> to vector<8x32xf32>
    %6 = arith.subf %0, %5 : vector<8x32xf32>
    %7 = arith.mulf %6, %6 : vector<8x32xf32>
    %cst_2 = arith.constant dense<0.000000e+00> : vector<8xf32>
    %8 = vector.multi_reduction <add>, %7, %cst_2 [1] : vector<8x32xf32> to vector<8xf32>
    %9 = vector.shape_cast %8 : vector<8xf32> to vector<8x1xf32>
    %cst_3 = arith.constant 3.200000e+01 : f32
    %10 = vector.broadcast %cst_3 : f32 to vector<8x1xf32>
    %11 = arith.divf %9, %10 : vector<8x1xf32>
    %cst_4 = arith.constant 9.99999996E-13 : f32
    %12 = vector.broadcast %cst_4 : f32 to vector<8x1xf32>
    %13 = arith.addf %11, %12 : vector<8x1xf32>
    %14 = math.rsqrt %13 : vector<8x1xf32>
    %c0_5 = arith.constant 0 : index
    %c0_6 = arith.constant 0 : index
    %15 = vector.load %arg2[%c0_5, %c0_6] : memref<1x32xf32, #tpu.memory_space<vmem>>, vector<1x32xf32>
    %c0_7 = arith.constant 0 : index
    %c0_8 = arith.constant 0 : index
    %16 = vector.load %arg3[%c0_7, %c0_8] : memref<1x32xf32, #tpu.memory_space<vmem>>, vector<1x32xf32>
    %17 = vector.broadcast %14 : vector<8x1xf32> to vector<8x32xf32>
    %18 = arith.mulf %6, %17 : vector<8x32xf32>
    %19 = vector.broadcast %15 : vector<1x32xf32> to vector<8x32xf32>
    %20 = arith.mulf %18, %19 : vector<8x32xf32>
    %21 = vector.broadcast %16 : vector<1x32xf32> to vector<8x32xf32>
    %22 = arith.addf %20, %21 : vector<8x32xf32>
    %c0_9 = arith.constant 0 : index
    %c0_10 = arith.constant 0 : index
    %23 = vector.load %arg4[%c0_9, %c0_10] : memref<8x32xf32, #tpu.memory_space<vmem>>, vector<8x32xf32>
    tpu.vector_store %arg4[%c0_9, %c0_10], %22 {strides = array<i32>} : memref<8x32xf32, #tpu.memory_space<vmem>>, vector<8x32xf32>,
    return
  }
  func.func @transform_0(%arg0: i32) -> (i32, i32) {
    %c0_i32 = arith.constant 0 : i32
    %c0_i32_0 = arith.constant 0 : i32
    return %arg0, %c0_i32 : i32, i32
  }
  func.func @transform_1(%arg0: i32) -> (i32, i32) {
    %c0_i32 = arith.constant 0 : i32
    %c0_i32_0 = arith.constant 0 : i32
    %c0_i32_1 = arith.constant 0 : i32
    return %c0_i32, %c0_i32_0 : i32, i32
  }
  func.func @transform_2(%arg0: i32) -> (i32, i32) {
    %c0_i32 = arith.constant 0 : i32
    %c0_i32_0 = arith.constant 0 : i32
    %c0_i32_1 = arith.constant 0 : i32
    return %c0_i32, %c0_i32_0 : i32, i32
  }
  func.func @transform_3(%arg0: i32) -> (i32, i32) {
    %c0_i32 = arith.constant 0 : i32
    %c0_i32_0 = arith.constant 0 : i32
    return %arg0, %c0_i32 : i32, i32
  }
}

</mosaic_0001>

<llo_original>
// kernel: tpu_custom_call.1
$region0: #{tpu_custom_call.1}
  #allocation0 [shape = 'u32[]', space=smem, size = 0x4, offset = 0x4, fixed_abs, tag = 'smem constant byte address 0x4 - core index']
  #allocation1 [shape = 'u32[72,128]{1,0:T(1,128)}', space=vmem, size = 0x9000, scoped, tag = 'internal scratch']
  %s0 = inlined_call_operand.hbm [shape: f32[16,32], index: 0, kind: input, shape index: {}]
  %s1 = inlined_call_operand.hbm [shape: f32[1,32], index: 1, kind: input, shape index: {}]
  %s2 = inlined_call_operand.vmem [shape: f32[1,32], index: 2, kind: input, shape index: {}]
  %s3 = inlined_call_operand.hbm [shape: f32[16,32], index: 3, kind: output, shape index: {}]
  %s4 = sld [smem:[#allocation0]]
  $region53: #{tpu_custom_call.1} parent=0
    _
  %s6 = ssub.s32 1, %s4
  %s7 = scalar_select 0, %s6, %s4
  $region1: #{tpu_custom_call.1} parent=0
    #allocation2 [shape = 'u8[8192]{0}', space=vmem, size = 0x2000, scoped, tag = 'input window, operand 0']
    #allocation3 [shape = 's32[2]{0}', space=sflag, size = 0x8, scoped, tag = 'scoped memory for tpu_custom_call.1']
    #allocation4 [shape = 's32[2]{0}', space=sflag, size = 0x8, scoped, tag = 'scoped memory for tpu_custom_call.1']
    #allocation5 [shape = 'u8[512]{0}', space=vmem, size = 0x400, scoped, tag = 'input window, operand 1, single buffered']
    #allocation6 [shape = 's32[1]{0}', space=sflag, size = 0x4, scoped, tag = 'scoped memory for tpu_custom_call.1']
    #allocation7 [shape = 'u8[8192]{0}', space=vmem, size = 0x2000, scoped, tag = 'output window, operand 0']
    %8 = vsyncpa [#allocation3], 0
    %s9 = scalar_lea.sflag [#allocation3], 1
    %10 = vsyncpa %s9, 0
    %11 = vsyncpa [#allocation6], 0
    %12 = vsyncpa [#allocation4], 0
    %s13 = scalar_lea.sflag [#allocation4], 1
    %14 = vsyncpa %s13, 0
    loop: start=0, step=1, limit=4
    $region2: #{tpu_custom_call.1} parent=1 // loop_pre_header
      _
    $region3: #{tpu_custom_call.1} parent=1 // loop_header
      %s16 = sphi 0, %s20
      %p17 = scmp.ge.s32.totalorder %s16, 4
      %s26 = sphi 0, %s28
      %s29 = sphi 0, %s26
      %s30 = sphi 0, %s29
      %s46 = sphi 0, %s30
      %s50 = sphi 0, %s50
      %s52 = sphi 0, %s50
      %s53 = sphi 0, %s52
      %s67 = sphi 0, %s53
      %s71 = sphi 0, %s71
      %s73 = sphi 0, %s71
      %s74 = sphi 0, %s73
      %s88 = sphi 0, %s74
      %s94 = sphi 0, %s96
      %s97 = sphi 0, %s94
      %s98 = sphi 0, %s97
      %s114 = sphi 0, %s98
    $region4: #{tpu_custom_call.1} parent=1 // loop_header_branch
      %19 = sbr.rel (%p17) target = $region8
    $region5: #{tpu_custom_call.1} parent=1 // loop_body
      %s21 = ssub.s32 %s16, 1
      %s22 = ssub.s32 %s16, 2
      %s23 = sadd.s32 %s16, 1
      %s24 = ssub.s32 %s16, %s23
      %p25 = scmp.eq.s32.totalorder %s24, 0
      %s27 = sadd.s32 %s26, 1
      %s28 = scalar_select %p25, %s26, %s27
      %p31 = pneg %p25
      %p32 = scmp.eq.s32.totalorder %s16, 1
      %p33 = por %p31, %p32
      %p34 = scmp.ne.s32.totalorder %s26, %s29
      %p35 = scmp.eq.s32.totalorder %s16, 0
      %p36 = por %p34, %p35
      %p37 = scmp.ne.s32.totalorder %s26, %s29
      %p38 = scmp.eq.s32.totalorder %s21, 1
      %p39 = por %p37, %p38
      %p40 = scmp.ne.s32.totalorder %s29, %s30
      %p41 = scmp.eq.s32.totalorder %s21, 0
      %p42 = por %p40, %p41
      %p43 = scmp.ne.s32.totalorder %s29, %s30
      %p44 = scmp.eq.s32.totalorder %s22, 1
      %p45 = por %p43, %p44
      %p47 = scmp.ne.s32.totalorder %s30, %s46
      %p48 = scmp.eq.s32.totalorder %s22, 0
      %p49 = por %p47, %p48
      %s51 = sadd.s32 %s50, 1
      %p54 = scmp.eq.s32.totalorder %s16, 1
      %p55 = scmp.ne.s32.totalorder %s50, %s52
      %p56 = scmp.eq.s32.totalorder %s16, 0
      %p57 = por %p55, %p56
      %p58 = scmp.ne.s32.totalorder %s50, %s52
      %p59 = scmp.eq.s32.totalorder %s21, 1
      %p60 = por %p58, %p59
      %p61 = scmp.ne.s32.totalorder %s52, %s53
      %p62 = scmp.eq.s32.totalorder %s21, 0
      %p63 = por %p61, %p62
      %p64 = scmp.ne.s32.totalorder %s52, %s53
      %p65 = scmp.eq.s32.totalorder %s22, 1
      %p66 = por %p64, %p65
      %p68 = scmp.ne.s32.totalorder %s53, %s67
      %p69 = scmp.eq.s32.totalorder %s22, 0
      %p70 = por %p68, %p69
      %s72 = sadd.s32 %s71, 1
      %p75 = scmp.eq.s32.totalorder %s16, 1
      %p76 = scmp.ne.s32.totalorder %s71, %s73
      %p77 = scmp.eq.s32.totalorder %s16, 0
      %p78 = por %p76, %p77
      %p79 = scmp.ne.s32.totalorder %s71, %s73
      %p80 = scmp.eq.s32.totalorder %s21, 1
      %p81 = por %p79, %p80
      %p82 = scmp.ne.s32.totalorder %s73, %s74
      %p83 = scmp.eq.s32.totalorder %s21, 0
      %p84 = por %p82, %p83
      %p85 = scmp.ne.s32.totalorder %s73, %s74
      %p86 = scmp.eq.s32.totalorder %s22, 1
      %p87 = por %p85, %p86
      %p89 = scmp.ne.s32.totalorder %s74, %s88
      %p90 = scmp.eq.s32.totalorder %s22, 0
      %p91 = por %p89, %p90
      %s92 = ssub.s32 %s16, %s23
      %p93 = scmp.eq.s32.totalorder %s92, 0
      %s95 = sadd.s32 %s94, 1
      %s96 = scalar_select %p93, %s94, %s95
      %p99 = pneg %p93
      %p100 = scmp.eq.s32.totalorder %s16, 1
      %p101 = por %p99, %p100
      %p102 = scmp.ne.s32.totalorder %s94, %s97
      %p103 = scmp.eq.s32.totalorder %s16, 0
      %p104 = por %p102, %p103
      %p105 = scmp.ne.s32.totalorder %s94, %s97
      %p106 = scmp.eq.s32.totalorder %s21, 1
      %p107 = por %p105, %p106
      %p108 = scmp.ne.s32.totalorder %s97, %s98
      %p109 = scmp.eq.s32.totalorder %s21, 0
      %p110 = por %p108, %p109
      %p111 = scmp.ne.s32.totalorder %s97, %s98
      %p112 = scmp.eq.s32.totalorder %s22, 1
      %p113 = por %p111, %p112
      %p115 = scmp.ne.s32.totalorder %s98, %s114
      %p116 = scmp.eq.s32.totalorder %s22, 0
      %p117 = por %p115, %p116
      %p118 = scmp.le.s32.totalorder 1, %s16
      %p119 = scmp.lt.s32.totalorder %s16, 3
      %p120 = pnand %p118, %p119
      %p121 = pneg %p120
      // Predicated region
      $region9: #{tpu_custom_call.1} parent=5 // pred_check
        _
      $region10: #{tpu_custom_call.1} parent=5 // pred_check_branch
        %123 = sbr.rel (%p120) target = $region12
      $region11: #{tpu_custom_call.1} parent=5 // pred_region
        %s124 = ssub.s32 %s16, 1
        // Predicated region
        $region13: #{tpu_custom_call.1} parent=11 // pred_check
          %p125 = pneg %p63
        $region14: #{tpu_custom_call.1} parent=11 // pred_check_branch
          %127 = sbr.rel (%p125) target = $region16
        $region15: #{tpu_custom_call.1} parent=11 // pred_region
          %129 = vsyncadd [#allocation6], 0
          %s131 = sshll.u32 %s1, 4
          %s132 = int_to_ptr.hbm [resolvable:$true] %s131
          %s133 = sshll.u32 [#allocation5], 4
          %s134 = int_to_ptr.vmem [resolvable:$true] %s133
          %136 = dma.hbm_to_vmem [thread:$0]  %s132, 16, %s134, [#allocation6]
        $region16: #{tpu_custom_call.1} parent=11 // pred_fallthru
          _
        // Predicated region
        $region17: #{tpu_custom_call.1} parent=11 // pred_check
          %p137 = pneg %p84
        $region18: #{tpu_custom_call.1} parent=11 // pred_check_branch
          %139 = sbr.rel (%p137) target = $region20
        $region19: #{tpu_custom_call.1} parent=11 // pred_region
          _
        $region20: #{tpu_custom_call.1} parent=11 // pred_fallthru
          _
      $region12: #{tpu_custom_call.1} parent=5 // pred_fallthru
        _
      %p140 = scmp.lt.s32.totalorder %s16, 2
      // Predicated region
      $region21: #{tpu_custom_call.1} parent=5 // pred_check
        %p141 = pneg %p140
      $region22: #{tpu_custom_call.1} parent=5 // pred_check_branch
        %143 = sbr.rel (%p141) target = $region24
      $region23: #{tpu_custom_call.1} parent=5 // pred_region
        // Predicated region
        $region25: #{tpu_custom_call.1} parent=23 // pred_check
          %p144 = pneg %p36
        $region26: #{tpu_custom_call.1} parent=23 // pred_check_branch
          %146 = sbr.rel (%p144) target = $region28
        $region27: #{tpu_custom_call.1} parent=23 // pred_region
          %s147 = sand.u32 %s26, 1
          %s148 = scalar_lea.sflag [#allocation3], %s147
          %s149 = sand.u32 %s26, 1
          %s150 = smul.addr %s149, 8
          %s151 = scalar_lea.vmem [#allocation2], %s150
          %153 = vsyncadd %s148, 0
          %s154 = smul.addr %s16, 8
          %s155 = scalar_lea.hbm %s0, %s154
          %s157 = sshll.u32 %s155, 4
          %s158 = int_to_ptr.hbm [resolvable:$true] %s157
          %s159 = sshll.u32 %s151, 4
          %s160 = int_to_ptr.vmem [resolvable:$true] %s159
          %162 = dma.hbm_to_vmem [thread:$0]  %s158, 128, %s160, %s148
        $region28: #{tpu_custom_call.1} parent=23 // pred_fallthru
          _
      $region24: #{tpu_custom_call.1} parent=5 // pred_fallthru
        _
      %p163 = scmp.le.s32.totalorder 1, %s16
      %p164 = scmp.lt.s32.totalorder %s16, 3
      %p165 = pnand %p163, %p164
      %p166 = pneg %p165
      // Predicated region
      $region29: #{tpu_custom_call.1} parent=5 // pred_check
        _
      $region30: #{tpu_custom_call.1} parent=5 // pred_check_branch
        %168 = sbr.rel (%p165) target = $region32
      $region31: #{tpu_custom_call.1} parent=5 // pred_region
        %s169 = ssub.s32 %s16, 1
        %s170 = sand.u32 %s29, 1
        %s171 = scalar_lea.sflag [#allocation3], %s170
        %s172 = sand.u32 %s29, 1
        %s173 = smul.addr %s172, 8
        %s174 = scalar_lea.vmem [#allocation2], %s173
        // Predicated region
        $region33: #{tpu_custom_call.1} parent=31 // pred_check
          %p175 = pneg %p42
        $region34: #{tpu_custom_call.1} parent=31 // pred_check_branch
          %177 = sbr.rel (%p175) target = $region36
        $region35: #{tpu_custom_call.1} parent=31 // pred_region
          %179 = dma.done %s171, 128
        $region36: #{tpu_custom_call.1} parent=31 // pred_fallthru
          _
        // Predicated region
        $region37: #{tpu_custom_call.1} parent=31 // pred_check
          %p180 = pneg %p63
        $region38: #{tpu_custom_call.1} parent=31 // pred_check_branch
          %182 = sbr.rel (%p180) target = $region40
        $region39: #{tpu_custom_call.1} parent=31 // pred_region
          %184 = dma.done [#allocation6], 16
        $region40: #{tpu_custom_call.1} parent=31 // pred_fallthru
          _
        %s185 = sand.u32 %s29, 1
        %s186 = scalar_lea.sflag [#allocation3], %s185
        %s187 = sand.u32 %s29, 1
        %s188 = smul.addr %s187, 8
        %s189 = scalar_lea.vmem [#allocation2], %s188
        %p190 = pneg %p42
        %p191 = pneg %p39
        %p192 = pneg %p63
        %p193 = pneg %p60
        %p194 = pneg %p84
        %p195 = pneg %p81
        %p196 = pneg %p110
        %p197 = pneg %p107
        %s198 = sand.u32 %s97, 1
        %s199 = scalar_lea.sflag [#allocation4], %s198
        %s200 = sand.u32 %s97, 1
        %s201 = smul.addr %s200, 8
        %s202 = scalar_lea.vmem [#allocation7], %s201
        %v203 = vld [vmem:[%s174] sm:$0xff]
        %vm204 = vcmask 261120
        %v205 = vsel %vm204, %v203, 0.0
        %206 = vadd.xlane.f32.xlu0 %v205
        %v207 = vpop.xlane.xlu0 %206
        %v208 = vrcp.pop 32.0
        %v209 = vmul.f32 32.0, %v208
        %v210 = vsub.f32 1.0, %v209
        %v211 = vmul.f32 %v208, %v210
        %v212 = vadd.f32 %v208, %v211
        %vm213 = vweird.f32 %v208
        %v214 = vsel %vm213, %v208, %v212
        %v215 = vmul.f32 %v207, %v214
        %v216 = vsub.f32 %v203, %v215
        %v217 = vmul.f32 %v216, %v216
        %v218 = vsel %vm204, %v217, 0.0
        %219 = vadd.xlane.f32.xlu0 %v218
        %v220 = vpop.xlane.xlu0 %219
        %v221 = vmul.f32 %v220, %v214
        %v222 = vadd.f32 %v221, 1e-12
        %v223 = vrsqrt.pop %v222
        %v224 = vmul.f32 %v223, %v222
        %v225 = vmul.f32 %v224, %v223
        %v226 = vmul.f32 0.5, %v225
        %v227 = vsub.f32 1.5, %v226
        %v228 = vmul.f32 %v223, %v227
        %vm229 = vweird.f32 %v222
        %vm230 = vweird.f32 %v223
        %vm231 = vmor %vm229, %vm230
        %v232 = vsel %vm231, %v223, %v228
        %v233 = vld [vmem:[#allocation5] sm:$0x1]
        %v234 = vld [vmem:[%s2] sm:$0x1]
        %v235 = vmul.f32 %v216, %v232
        %v237 = vperm.slane %v233, 0
        %v239 = vmul.f32 %v235, %v237
        %v241 = vperm.slane %v234, 0
        %v243 = vadd.f32 %v239, %v241
        %244 = vst.msk [vmem:[%s202] sm:$0xff] %vm204, %v243
        %s245 = sand.u32 %s97, 1
        %s246 = scalar_lea.sflag [#allocation4], %s245
        %s247 = sand.u32 %s97, 1
        %s248 = smul.addr %s247, 8
        %s249 = scalar_lea.vmem [#allocation7], %s248
        // Predicated region
        $region41: #{tpu_custom_call.1} parent=31 // pred_check
          %p250 = pneg %p107
        $region42: #{tpu_custom_call.1} parent=31 // pred_check_branch
          %252 = sbr.rel (%p250) target = $region44
        $region43: #{tpu_custom_call.1} parent=31 // pred_region
          %254 = vsyncadd %s246, 0
          %s255 = smul.addr %s21, 8
          %s256 = scalar_lea.hbm %s3, %s255
          %s258 = sshll.u32 %s249, 4
          %s259 = int_to_ptr.vmem [resolvable:$true] %s258
          %s260 = sshll.u32 %s256, 4
          %s261 = int_to_ptr.hbm [resolvable:$true] %s260
          %263 = dma.vmem_to_hbm [thread:$0]  %s259, 128, %s261, %s246
        $region44: #{tpu_custom_call.1} parent=31 // pred_fallthru
          _
      $region32: #{tpu_custom_call.1} parent=5 // pred_fallthru
        _
      %p264 = scmp.le.s32.totalorder 2, %s16
      // Predicated region
      $region45: #{tpu_custom_call.1} parent=5 // pred_check
        %p265 = pneg %p264
      $region46: #{tpu_custom_call.1} parent=5 // pred_check_branch
        %267 = sbr.rel (%p265) target = $region48
      $region47: #{tpu_custom_call.1} parent=5 // pred_region
        %s268 = ssub.s32 %s16, 2
        // Predicated region
        $region49: #{tpu_custom_call.1} parent=47 // pred_check
          %p269 = pneg %p113
        $region50: #{tpu_custom_call.1} parent=47 // pred_check_branch
          %271 = sbr.rel (%p269) target = $region52
        $region51: #{tpu_custom_call.1} parent=47 // pred_region
          %s272 = sand.u32 %s98, 1
          %s273 = scalar_lea.sflag [#allocation4], %s272
          %s274 = sand.u32 %s98, 1
          %s275 = smul.addr %s274, 8
          %s276 = scalar_lea.vmem [#allocation7], %s275
          %278 = dma.done %s273, 128
        $region52: #{tpu_custom_call.1} parent=47 // pred_fallthru
          _
      $region48: #{tpu_custom_call.1} parent=5 // pred_fallthru
        _
    $region6: #{tpu_custom_call.1} parent=1 // loop_footer
      %s20 = sadd.s32 1, %s16
    $region7: #{tpu_custom_call.1} parent=1 // loop_footer_branch
      %15 = sbr.rel target = $region3
    $region8: #{tpu_custom_call.1} parent=1 // loop_exit
      _
    %279 = vsyncpa [#allocation3], 1
    %s280 = scalar_lea.sflag [#allocation3], 1
    %281 = vsyncpa %s280, 1
    %282 = vsyncpa [#allocation6], 1
    %283 = vsyncpa [#allocation4], 1
    %s284 = scalar_lea.sflag [#allocation4], 1
    %285 = vsyncpa %s284, 1

</llo_original>
